<compile_context>
chip_gen: v7x
topology: tpu7x:2x2x1
jax: 0.10.0
libtpu: 0.0.40
codegen_flags: <defaults>
</compile_context>

<pallas_src>
import functools

import jax
import jax.numpy as jnp
from jax.experimental import pallas as pl
from jax.experimental.pallas import tpu as pltpu


def _dilconv_kernel(x_ref, dw_pack_ref, pw_pack_ref, out_ref, *,
                    K, dilation, padding, H, W, halo, N, C_in, C_out):
    """Single grid step; activations in (N*C_in, H*W) layout."""
    f32 = jnp.float32
    HW = H * W
    R = N * C_in

    # ---- BatchNorm (folded scale/shift planes) + ReLU -----------------------
    x = x_ref[...].astype(f32)                                   # (R, HW)
    y = jnp.maximum(x * dw_pack_ref[0] + dw_pack_ref[1], 0.0)

    # ---- lane-aligned zero halo: every dilated tap is a static slice --------
    zhalo = jnp.zeros((R, halo), f32)
    ypad = jnp.concatenate([zhalo, y, zhalo], axis=1)            # (R, HW+2*halo)

    # ---- dilated depthwise conv: K*K unrolled taps, pre-masked weights ------
    acc = jnp.zeros((R, HW), f32)
    for kh in range(K):
        for kw in range(K):
            off = (kh * dilation - padding) * W + (kw * dilation - padding)
            win = ypad[:, halo + off:halo + off + HW]            # (R, HW)
            acc = acc + win * dw_pack_ref[2 + kh * K + kw]       # masked weight plane
    # (depthwise bias is folded into the fused pointwise bias by the wrapper)

    # ---- 1x1 pointwise conv: per-batch C_in outer-product FMAs on the VPU ---
    # TODO(synk): switch to a single MXU jnp.dot once C_in/C_out reach ~128.
    bias = pw_pack_ref[C_in]                                     # (C_out, 1)
    outs = []
    for n in range(N):
        o = bias + pw_pack_ref[0] * acc[n * C_in:n * C_in + 1, :]
        for c in range(1, C_in):
            o = o + pw_pack_ref[c] * acc[n * C_in + c:n * C_in + c + 1, :]
        outs.append(o)                                           # (C_out, HW)
    out_ref[...] = jnp.concatenate(outs, axis=0).astype(out_ref.dtype)


def dilconv_forward(x_nchw, params, *, kernel_size, stride, padding, dilation,
                    eps=1e-5):
    gamma, beta, mean, var, dw_w, dw_b, pw_w, pw_b = params
    N, C_in, H, W = x_nchw.shape
    C_out = pw_w.shape[1]
    K = kernel_size
    Ho = (H + 2 * padding - dilation * (K - 1) - 1) // stride + 1
    Wo = (W + 2 * padding - dilation * (K - 1) - 1) // stride + 1
    if stride != 1 or (Ho, Wo) != (H, W):
        # TODO(synk): general stride / non-'same' padding path (unstrided tap
        # accumulation + one downselect); NAS DilConv always uses 'same' config.
        raise NotImplementedError(
            "Pallas DilConv fast path requires stride=1 and "
            "2*padding == dilation*(kernel_size-1)")
    HW = H * W
    f32 = jnp.float32

    # Fold BN (inference / running stats) into (scale, shift); fold the
    # depthwise bias into the pointwise bias: dw_b @ pw_w + pw_b.
    scale = gamma.astype(f32) * jax.lax.rsqrt(var.astype(f32) + eps)
    shift = beta.astype(f32) - mean.astype(f32) * scale
    fused_b = dw_b.astype(f32) @ pw_w.astype(f32) + pw_b.astype(f32)

    # BN scale/shift as (N*C_in, HW) broadcast planes (batch-tiled).
    scale_p = jnp.broadcast_to(jnp.tile(scale, N)[:, None], (N * C_in, HW))
    shift_p = jnp.broadcast_to(jnp.tile(shift, N)[:, None], (N * C_in, HW))

    # Depthwise tap weight planes with the per-kw W-wrap column mask
    # pre-multiplied in, batch-tiled: (K*K, N*C_in, HW).
    wcol = jnp.arange(W, dtype=jnp.int32)
    planes = []
    for kh in range(K):
        for kw in range(K):
            dwo = kw * dilation - padding
            colmask = ((wcol + dwo >= 0) & (wcol + dwo < W)).astype(f32)
            mask_hw = jnp.tile(colmask, H)                            # (HW,)
            plane = dw_w[kh, kw, :].astype(f32)[:, None] * mask_hw[None, :]
            planes.append(jnp.tile(plane, (N, 1)))                    # (N*C_in, HW)
    dw_planes = jnp.stack(planes)                                     # (K*K, N*C_in, HW)

    # Packed parameter arrays -> two DMAs instead of six.
    dw_pack = jnp.concatenate([scale_p[None], shift_p[None], dw_planes], axis=0)
    pw_pack = jnp.concatenate([pw_w.astype(f32), fused_b[None, :]],
                              axis=0)[:, :, None]                     # (C_in+1, C_out, 1)

    # Flattened NCHW with batch folded into sublanes: (N*C_in, HW).
    x_flat = x_nchw.reshape(N * C_in, HW).astype(f32)

    # Lane-aligned halo, >= padding*(W+1) so every tap offset stays in-bounds.
    halo = max(128, ((padding * (W + 1) + 127) // 128) * 128)

    kernel = functools.partial(_dilconv_kernel, K=K, dilation=dilation,
                               padding=padding, H=H, W=W, halo=halo,
                               N=N, C_in=C_in, C_out=C_out)

    out = pl.pallas_call(
        kernel,
        out_shape=jax.ShapeDtypeStruct((N * C_out, HW), f32),
        grid=(1,),
        in_specs=[
            pl.BlockSpec((N * C_in, HW), lambda i: (0, 0)),             # x (flattened NCHW)
            pl.BlockSpec((K * K + 2, N * C_in, HW), lambda i: (0, 0, 0)),  # packed BN + dw taps
            pl.BlockSpec((C_in + 1, C_out, 1), lambda i: (0, 0, 0)),       # packed pw weight + bias
        ],
        out_specs=pl.BlockSpec((N * C_out, HW), lambda i: (0, 0)),
        compiler_params=pltpu.CompilerParams(
            dimension_semantics=("arbitrary",)),
    )(x_flat, dw_pack, pw_pack)

    return out.reshape(N, C_out, H, W)          # already NCHW, no transpose


def reference_forward(x_nchw, params, *, kernel_size, stride, padding, dilation):
    """Pure JAX/XLA reference (no Pallas) for the correctness check."""
    gamma, beta, mean, var, dw_w, dw_b, pw_w, pw_b = params
    eps = 1e-5
    C_in = x_nchw.shape[1]
    x = jnp.transpose(x_nchw, (0, 2, 3, 1))                     # NHWC
    y = (x - mean) * (gamma / jnp.sqrt(var + eps)) + beta
    y = jnp.maximum(y, 0.0)
    y = jax.lax.conv_general_dilated(
        y, dw_w[:, :, None, :],                                  # HWIO, I=1
        window_strides=(stride, stride),
        padding=[(padding, padding), (padding, padding)],
        rhs_dilation=(dilation, dilation),
        dimension_numbers=('NHWC', 'HWIO', 'NHWC'),
        feature_group_count=C_in)
    y = y + dw_b
    y = jax.lax.conv_general_dilated(
        y, pw_w[None, None, :, :], (1, 1), 'VALID',
        dimension_numbers=('NHWC', 'HWIO', 'NHWC'))
    y = y + pw_b
    return jnp.transpose(y, (0, 3, 1, 2))


if __name__ == "__main__":
    # DilConv(C_in=4, C_out=8, kernel=3, stride=1, pad=2, dil=2) on 2x4x16x16.
    N, C_in, C_out, H, W = 2, 4, 8, 16, 16
    kernel_size, stride, padding, dilation = 3, 1, 2, 2

    key = jax.random.PRNGKey(0)
    xk, *pk = jax.random.split(key, 8)
    x = jax.random.normal(xk, (N, C_in, H, W), jnp.float32)
    gamma = jax.random.uniform(pk[0], (C_in,), jnp.float32, 0.5, 1.5)
    beta = 0.1 * jax.random.normal(pk[1], (C_in,), jnp.float32)
    running_mean = 0.1 * jax.random.normal(pk[2], (C_in,), jnp.float32)
    running_var = jax.random.uniform(pk[3], (C_in,), jnp.float32, 0.5, 1.5)
    dw_w = 0.2 * jax.random.normal(pk[4], (kernel_size, kernel_size, C_in),
                                   jnp.float32)
    dw_b = jnp.linspace(-0.1, 0.1, C_in, dtype=jnp.float32)
    pw_w = 0.3 * jax.random.normal(pk[5], (C_in, C_out), jnp.float32)
    pw_b = jnp.linspace(-0.05, 0.05, C_out, dtype=jnp.float32)
    params = (gamma, beta, running_mean, running_var, dw_w, dw_b, pw_w, pw_b)

    ref = reference_forward(x, params, kernel_size=kernel_size, stride=stride,
                            padding=padding, dilation=dilation)

    out = dilconv_forward(x, params, kernel_size=kernel_size, stride=stride,
                          padding=padding, dilation=dilation)
    out = jax.block_until_ready(out)
    assert out.shape == (N, C_out, H, W), out.shape
    err = float(jnp.max(jnp.abs(out.astype(jnp.float32) - ref)))
    assert err < 1e-4, f"max abs error {err}"

    print("KERNEL_OK")
</pallas_src>

<mosaic_0001>
module attributes {stable_mosaic.version = 11 : i64} {
  func.func @_dilconv_kernel(%arg0: i32, %arg1: memref<8x256xf32, #tpu.memory_space<vmem>>, %arg2: memref<11x8x256xf32, #tpu.memory_space<vmem>>, %arg3: memref<5x8x1xf32, #tpu.memory_space<vmem>>, %arg4: memref<16x256xf32, #tpu.memory_space<vmem>>) attributes {dimension_semantics = [#tpu.dimension_semantics<arbitrary>], iteration_bounds = array<i64: 1>, scalar_prefetch = 0 : i64, scratch_operands = 0 : i64, tpu.core_type = #tpu.core_type<tc>, window_params = [{pipeline_mode = #tpu.pipeline_mode<synchronous>, transform_indices = @transform_0, window_bounds = array<i64: 8, 256>}, {pipeline_mode = #tpu.pipeline_mode<synchronous>, transform_indices = @transform_1, window_bounds = array<i64: 11, 8, 256>}, {pipeline_mode = #tpu.pipeline_mode<synchronous>, transform_indices = @transform_2, window_bounds = array<i64: 5, 8, 1>}, {pipeline_mode = #tpu.pipeline_mode<synchronous>, transform_indices = @transform_3, window_bounds = array<i64: 16, 256>}]} {
    %c0 = arith.constant 0 : index
    %c0_0 = arith.constant 0 : index
    %0 = vector.load %arg1[%c0, %c0_0] : memref<8x256xf32, #tpu.memory_space<vmem>>, vector<8x256xf32>
    %c0_1 = arith.constant 0 : index
    %c0_2 = arith.constant 0 : index
    %c0_3 = arith.constant 0 : index
    %1 = vector.load %arg2[%c0_1, %c0_2, %c0_3] : memref<11x8x256xf32, #tpu.memory_space<vmem>>, vector<1x8x256xf32>
    %2 = vector.shape_cast %1 : vector<1x8x256xf32> to vector<8x256xf32>
    %3 = arith.mulf %0, %2 : vector<8x256xf32>
    %c1 = arith.constant 1 : index
    %c0_4 = arith.constant 0 : index
    %c0_5 = arith.constant 0 : index
    %4 = vector.load %arg2[%c1, %c0_4, %c0_5] : memref<11x8x256xf32, #tpu.memory_space<vmem>>, vector<1x8x256xf32>
    %5 = vector.shape_cast %4 : vector<1x8x256xf32> to vector<8x256xf32>
    %6 = arith.addf %3, %5 : vector<8x256xf32>
    %cst = arith.constant 0.000000e+00 : f32
    %7 = vector.broadcast %cst : f32 to vector<8x256xf32>
    %8 = arith.maximumf %6, %7 : vector<8x256xf32>
    %cst_6 = arith.constant 0.000000e+00 : f32
    %9 = vector.broadcast %cst_6 : f32 to vector<8x128xf32>
    %10 = tpu.concatenate %9, %8, %9 in 1 : vector<8x128xf32>, vector<8x256xf32>, vector<8x128xf32> -> vector<8x512xf32>
    %cst_7 = arith.constant 0.000000e+00 : f32
    %11 = vector.broadcast %cst_7 : f32 to vector<8x256xf32>
    %12 = vector.extract_strided_slice %10 {offsets = [0, 94], sizes = [8, 256], strides = [1, 1]} : vector<8x512xf32> to vector<8x256xf32>
    %c2 = arith.constant 2 : index
    %c0_8 = arith.constant 0 : index
    %c0_9 = arith.constant 0 : index
    %13 = vector.load %arg2[%c2, %c0_8, %c0_9] : memref<11x8x256xf32, #tpu.memory_space<vmem>>, vector<1x8x256xf32>
    %14 = vector.shape_cast %13 : vector<1x8x256xf32> to vector<8x256xf32>
    %15 = arith.mulf %12, %14 : vector<8x256xf32>
    %16 = arith.addf %11, %15 : vector<8x256xf32>
    %17 = vector.extract_strided_slice %10 {offsets = [0, 96], sizes = [8, 256], strides = [1, 1]} : vector<8x512xf32> to vector<8x256xf32>
    %c3 = arith.constant 3 : index
    %c0_10 = arith.constant 0 : index
    %c0_11 = arith.constant 0 : index
    %18 = vector.load %arg2[%c3, %c0_10, %c0_11] : memref<11x8x256xf32, #tpu.memory_space<vmem>>, vector<1x8x256xf32>
    %19 = vector.shape_cast %18 : vector<1x8x256xf32> to vector<8x256xf32>
    %20 = arith.mulf %17, %19 : vector<8x256xf32>
    %21 = arith.addf %16, %20 : vector<8x256xf32>
    %22 = vector.extract_strided_slice %10 {offsets = [0, 98], sizes = [8, 256], strides = [1, 1]} : vector<8x512xf32> to vector<8x256xf32>
    %c4 = arith.constant 4 : index
    %c0_12 = arith.constant 0 : index
    %c0_13 = arith.constant 0 : index
    %23 = vector.load %arg2[%c4, %c0_12, %c0_13] : memref<11x8x256xf32, #tpu.memory_space<vmem>>, vector<1x8x256xf32>
    %24 = vector.shape_cast %23 : vector<1x8x256xf32> to vector<8x256xf32>
    %25 = arith.mulf %22, %24 : vector<8x256xf32>
    %26 = arith.addf %21, %25 : vector<8x256xf32>
    %27 = vector.extract_strided_slice %10 {offsets = [0, 126], sizes = [8, 256], strides = [1, 1]} : vector<8x512xf32> to vector<8x256xf32>
    %c5 = arith.constant 5 : index
    %c0_14 = arith.constant 0 : index
    %c0_15 = arith.constant 0 : index
    %28 = vector.load %arg2[%c5, %c0_14, %c0_15] : memref<11x8x256xf32, #tpu.memory_space<vmem>>, vector<1x8x256xf32>
    %29 = vector.shape_cast %28 : vector<1x8x256xf32> to vector<8x256xf32>
    %30 = arith.mulf %27, %29 : vector<8x256xf32>
    %31 = arith.addf %26, %30 : vector<8x256xf32>
    %32 = vector.extract_strided_slice %10 {offsets = [0, 128], sizes = [8, 256], strides = [1, 1]} : vector<8x512xf32> to vector<8x256xf32>
    %c6 = arith.constant 6 : index
    %c0_16 = arith.constant 0 : index
    %c0_17 = arith.constant 0 : index
    %33 = vector.load %arg2[%c6, %c0_16, %c0_17] : memref<11x8x256xf32, #tpu.memory_space<vmem>>, vector<1x8x256xf32>
    %34 = vector.shape_cast %33 : vector<1x8x256xf32> to vector<8x256xf32>
    %35 = arith.mulf %32, %34 : vector<8x256xf32>
    %36 = arith.addf %31, %35 : vector<8x256xf32>
    %37 = vector.extract_strided_slice %10 {offsets = [0, 130], sizes = [8, 256], strides = [1, 1]} : vector<8x512xf32> to vector<8x256xf32>
    %c7 = arith.constant 7 : index
    %c0_18 = arith.constant 0 : index
    %c0_19 = arith.constant 0 : index
    %38 = vector.load %arg2[%c7, %c0_18, %c0_19] : memref<11x8x256xf32, #tpu.memory_space<vmem>>, vector<1x8x256xf32>
    %39 = vector.shape_cast %38 : vector<1x8x256xf32> to vector<8x256xf32>
    %40 = arith.mulf %37, %39 : vector<8x256xf32>
    %41 = arith.addf %36, %40 : vector<8x256xf32>
    %42 = vector.extract_strided_slice %10 {offsets = [0, 158], sizes = [8, 256], strides = [1, 1]} : vector<8x512xf32> to vector<8x256xf32>
    %c8 = arith.constant 8 : index
    %c0_20 = arith.constant 0 : index
    %c0_21 = arith.constant 0 : index
    %43 = vector.load %arg2[%c8, %c0_20, %c0_21] : memref<11x8x256xf32, #tpu.memory_space<vmem>>, vector<1x8x256xf32>
    %44 = vector.shape_cast %43 : vector<1x8x256xf32> to vector<8x256xf32>
    %45 = arith.mulf %42, %44 : vector<8x256xf32>
    %46 = arith.addf %41, %45 : vector<8x256xf32>
    %47 = vector.extract_strided_slice %10 {offsets = [0, 160], sizes = [8, 256], strides = [1, 1]} : vector<8x512xf32> to vector<8x256xf32>
    %c9 = arith.constant 9 : index
    %c0_22 = arith.constant 0 : index
    %c0_23 = arith.constant 0 : index
    %48 = vector.load %arg2[%c9, %c0_22, %c0_23] : memref<11x8x256xf32, #tpu.memory_space<vmem>>, vector<1x8x256xf32>
    %49 = vector.shape_cast %48 : vector<1x8x256xf32> to vector<8x256xf32>
    %50 = arith.mulf %47, %49 : vector<8x256xf32>
    %51 = arith.addf %46, %50 : vector<8x256xf32>
    %52 = vector.extract_strided_slice %10 {offsets = [0, 162], sizes = [8, 256], strides = [1, 1]} : vector<8x512xf32> to vector<8x256xf32>
    %c10 = arith.constant 10 : index
    %c0_24 = arith.constant 0 : index
    %c0_25 = arith.constant 0 : index
    %53 = vector.load %arg2[%c10, %c0_24, %c0_25] : memref<11x8x256xf32, #tpu.memory_space<vmem>>, vector<1x8x256xf32>
    %54 = vector.shape_cast %53 : vector<1x8x256xf32> to vector<8x256xf32>
    %55 = arith.mulf %52, %54 : vector<8x256xf32>
    %56 = arith.addf %51, %55 : vector<8x256xf32>
    %c4_26 = arith.constant 4 : index
    %c0_27 = arith.constant 0 : index
    %c0_28 = arith.constant 0 : index
    %57 = vector.load %arg3[%c4_26, %c0_27, %c0_28] : memref<5x8x1xf32, #tpu.memory_space<vmem>>, vector<1x8x1xf32>
    %58 = vector.shape_cast %57 : vector<1x8x1xf32> to vector<8x1xf32>
    %c0_29 = arith.constant 0 : index
    %c0_30 = arith.constant 0 : index
    %c0_31 = arith.constant 0 : index
    %59 = vector.load %arg3[%c0_29, %c0_30, %c0_31] : memref<5x8x1xf32, #tpu.memory_space<vmem>>, vector<1x8x1xf32>
    %60 = vector.shape_cast %59 : vector<1x8x1xf32> to vector<8x1xf32>
    %61 = vector.extract_strided_slice %56 {offsets = [0, 0], sizes = [1, 256], strides = [1, 1]} : vector<8x256xf32> to vector<1x256xf32>
    %62 = vector.broadcast %60 : vector<8x1xf32> to vector<8x256xf32>
    %63 = vector.broadcast %61 : vector<1x256xf32> to vector<8x256xf32>
    %64 = arith.mulf %62, %63 : vector<8x256xf32>
    %65 = vector.broadcast %58 : vector<8x1xf32> to vector<8x256xf32>
    %66 = arith.addf %65, %64 : vector<8x256xf32>
    %c1_32 = arith.constant 1 : index
    %c0_33 = arith.constant 0 : index
    %c0_34 = arith.constant 0 : index
    %67 = vector.load %arg3[%c1_32, %c0_33, %c0_34] : memref<5x8x1xf32, #tpu.memory_space<vmem>>, vector<1x8x1xf32>
    %68 = vector.shape_cast %67 : vector<1x8x1xf32> to vector<8x1xf32>
    %69 = vector.extract_strided_slice %56 {offsets = [1, 0], sizes = [1, 256], strides = [1, 1]} : vector<8x256xf32> to vector<1x256xf32>
    %70 = vector.broadcast %68 : vector<8x1xf32> to vector<8x256xf32>
    %71 = vector.broadcast %69 : vector<1x256xf32> to vector<8x256xf32>
    %72 = arith.mulf %70, %71 : vector<8x256xf32>
    %73 = arith.addf %66, %72 : vector<8x256xf32>
    %c2_35 = arith.constant 2 : index
    %c0_36 = arith.constant 0 : index
    %c0_37 = arith.constant 0 : index
    %74 = vector.load %arg3[%c2_35, %c0_36, %c0_37] : memref<5x8x1xf32, #tpu.memory_space<vmem>>, vector<1x8x1xf32>
    %75 = vector.shape_cast %74 : vector<1x8x1xf32> to vector<8x1xf32>
    %76 = vector.extract_strided_slice %56 {offsets = [2, 0], sizes = [1, 256], strides = [1, 1]} : vector<8x256xf32> to vector<1x256xf32>
    %77 = vector.broadcast %75 : vector<8x1xf32> to vector<8x256xf32>
    %78 = vector.broadcast %76 : vector<1x256xf32> to vector<8x256xf32>
    %79 = arith.mulf %77, %78 : vector<8x256xf32>
    %80 = arith.addf %73, %79 : vector<8x256xf32>
    %c3_38 = arith.constant 3 : index
    %c0_39 = arith.constant 0 : index
    %c0_40 = arith.constant 0 : index
    %81 = vector.load %arg3[%c3_38, %c0_39, %c0_40] : memref<5x8x1xf32, #tpu.memory_space<vmem>>, vector<1x8x1xf32>
    %82 = vector.shape_cast %81 : vector<1x8x1xf32> to vector<8x1xf32>
    %83 = vector.extract_strided_slice %56 {offsets = [3, 0], sizes = [1, 256], strides = [1, 1]} : vector<8x256xf32> to vector<1x256xf32>
    %84 = vector.broadcast %82 : vector<8x1xf32> to vector<8x256xf32>
    %85 = vector.broadcast %83 : vector<1x256xf32> to vector<8x256xf32>
    %86 = arith.mulf %84, %85 : vector<8x256xf32>
    %87 = arith.addf %80, %86 : vector<8x256xf32>
    %c0_41 = arith.constant 0 : index
    %c0_42 = arith.constant 0 : index
    %c0_43 = arith.constant 0 : index
    %88 = vector.load %arg3[%c0_41, %c0_42, %c0_43] : memref<5x8x1xf32, #tpu.memory_space<vmem>>, vector<1x8x1xf32>
    %89 = vector.shape_cast %88 : vector<1x8x1xf32> to vector<8x1xf32>
    %90 = vector.extract_strided_slice %56 {offsets = [4, 0], sizes = [1, 256], strides = [1, 1]} : vector<8x256xf32> to vector<1x256xf32>
    %91 = vector.broadcast %89 : vector<8x1xf32> to vector<8x256xf32>
    %92 = vector.broadcast %90 : vector<1x256xf32> to vector<8x256xf32>
    %93 = arith.mulf %91, %92 : vector<8x256xf32>
    %94 = vector.broadcast %58 : vector<8x1xf32> to vector<8x256xf32>
    %95 = arith.addf %94, %93 : vector<8x256xf32>
    %c1_44 = arith.constant 1 : index
    %c0_45 = arith.constant 0 : index
    %c0_46 = arith.constant 0 : index
    %96 = vector.load %arg3[%c1_44, %c0_45, %c0_46] : memref<5x8x1xf32, #tpu.memory_space<vmem>>, vector<1x8x1xf32>
    %97 = vector.shape_cast %96 : vector<1x8x1xf32> to vector<8x1xf32>
    %98 = vector.extract_strided_slice %56 {offsets = [5, 0], sizes = [1, 256], strides = [1, 1]} : vector<8x256xf32> to vector<1x256xf32>
    %99 = vector.broadcast %97 : vector<8x1xf32> to vector<8x256xf32>
    %100 = vector.broadcast %98 : vector<1x256xf32> to vector<8x256xf32>
    %101 = arith.mulf %99, %100 : vector<8x256xf32>
    %102 = arith.addf %95, %101 : vector<8x256xf32>
    %c2_47 = arith.constant 2 : index
    %c0_48 = arith.constant 0 : index
    %c0_49 = arith.constant 0 : index
    %103 = vector.load %arg3[%c2_47, %c0_48, %c0_49] : memref<5x8x1xf32, #tpu.memory_space<vmem>>, vector<1x8x1xf32>
    %104 = vector.shape_cast %103 : vector<1x8x1xf32> to vector<8x1xf32>
    %105 = vector.extract_strided_slice %56 {offsets = [6, 0], sizes = [1, 256], strides = [1, 1]} : vector<8x256xf32> to vector<1x256xf32>
    %106 = vector.broadcast %104 : vector<8x1xf32> to vector<8x256xf32>
    %107 = vector.broadcast %105 : vector<1x256xf32> to vector<8x256xf32>
    %108 = arith.mulf %106, %107 : vector<8x256xf32>
    %109 = arith.addf %102, %108 : vector<8x256xf32>
    %c3_50 = arith.constant 3 : index
    %c0_51 = arith.constant 0 : index
    %c0_52 = arith.constant 0 : index
    %110 = vector.load %arg3[%c3_50, %c0_51, %c0_52] : memref<5x8x1xf32, #tpu.memory_space<vmem>>, vector<1x8x1xf32>
    %111 = vector.shape_cast %110 : vector<1x8x1xf32> to vector<8x1xf32>
    %112 = vector.extract_strided_slice %56 {offsets = [7, 0], sizes = [1, 256], strides = [1, 1]} : vector<8x256xf32> to vector<1x256xf32>
    %113 = vector.broadcast %111 : vector<8x1xf32> to vector<8x256xf32>
    %114 = vector.broadcast %112 : vector<1x256xf32> to vector<8x256xf32>
    %115 = arith.mulf %113, %114 : vector<8x256xf32>
    %116 = arith.addf %109, %115 : vector<8x256xf32>
    %117 = tpu.concatenate %87, %116 in 0 : vector<8x256xf32>, vector<8x256xf32> -> vector<16x256xf32>
    %c0_53 = arith.constant 0 : index
    %c0_54 = arith.constant 0 : index
    %118 = vector.load %arg4[%c0_53, %c0_54] : memref<16x256xf32, #tpu.memory_space<vmem>>, vector<16x256xf32>
    tpu.vector_store %arg4[%c0_53, %c0_54], %117 {strides = array<i32>} : memref<16x256xf32, #tpu.memory_space<vmem>>, vector<16x256xf32>,
    return
  }
  func.func @transform_0(%arg0: i32) -> (i32, i32) {
    %c0_i32 = arith.constant 0 : i32
    %c0_i32_0 = arith.constant 0 : i32
    %c0_i32_1 = arith.constant 0 : i32
    return %c0_i32, %c0_i32_0 : i32, i32
  }
  func.func @transform_1(%arg0: i32) -> (i32, i32, i32) {
    %c0_i32 = arith.constant 0 : i32
    %c0_i32_0 = arith.constant 0 : i32
    %c0_i32_1 = arith.constant 0 : i32
    %c0_i32_2 = arith.constant 0 : i32
    return %c0_i32, %c0_i32_0, %c0_i32_1 : i32, i32, i32
  }
  func.func @transform_2(%arg0: i32) -> (i32, i32, i32) {
    %c0_i32 = arith.constant 0 : i32
    %c0_i32_0 = arith.constant 0 : i32
    %c0_i32_1 = arith.constant 0 : i32
    %c0_i32_2 = arith.constant 0 : i32
    return %c0_i32, %c0_i32_0, %c0_i32_1 : i32, i32, i32
  }
  func.func @transform_3(%arg0: i32) -> (i32, i32) {
    %c0_i32 = arith.constant 0 : i32
    %c0_i32_0 = arith.constant 0 : i32
    %c0_i32_1 = arith.constant 0 : i32
    return %c0_i32, %c0_i32_0 : i32, i32
  }
}

</mosaic_0001>

<llo_original>
// kernel: tpu_custom_call.1
$region0: #{tpu_custom_call.1}
  #allocation0 [shape = 'u32[]', space=smem, size = 0x4, offset = 0x4, fixed_abs, tag = 'smem constant byte address 0x4 - core index']
  #allocation1 [shape = 'u32[144,128]{1,0:T(1,128)}', space=vmem, size = 0x12000, scoped, tag = 'internal scratch']
  %s0 = inlined_call_operand.vmem [shape: f32[8,256], index: 0, kind: input, shape index: {}]
  %s1 = inlined_call_operand.hbm [shape: f32[11,8,256], index: 1, kind: input, shape index: {}]
  %s2 = inlined_call_operand.vmem [shape: f32[5,8,1], index: 2, kind: input, shape index: {}]
  %s3 = inlined_call_operand.hbm [shape: f32[16,256], index: 3, kind: output, shape index: {}]
  %s4 = sld [smem:[#allocation0]]
  $region26: #{tpu_custom_call.1} parent=0
    _
  %s6 = ssub.s32 1, %s4
  %s7 = scalar_select 0, %s6, %s4
  $region1: #{tpu_custom_call.1} parent=0
    #allocation2 [shape = 'u8[90112]{0}', space=vmem, size = 0x16000, scoped, tag = 'input window, operand 1, single buffered']
    #allocation3 [shape = 's32[1]{0}', space=sflag, size = 0x4, scoped, tag = 'scoped memory for tpu_custom_call.1']
    #allocation4 [shape = 's32[1]{0}', space=sflag, size = 0x4, scoped, tag = 'scoped memory for tpu_custom_call.1']
    #allocation5 [shape = 'u8[16384]{0}', space=vmem, size = 0x4000, scoped, tag = 'output window, operand 0, single buffered']
    %8 = vsyncpa [#allocation3], 0
    %9 = vsyncpa [#allocation4], 0
    // Predicated region
    $region2: #{tpu_custom_call.1} parent=1 // pred_check
      _
    $region3: #{tpu_custom_call.1} parent=1 // pred_check_branch
      %11 = sbr.rel (0) target = $region5
    $region4: #{tpu_custom_call.1} parent=1 // pred_region
      _
    $region5: #{tpu_custom_call.1} parent=1 // pred_fallthru
      _
    // Predicated region
    $region6: #{tpu_custom_call.1} parent=1 // pred_check
      _
    $region7: #{tpu_custom_call.1} parent=1 // pred_check_branch
      %13 = sbr.rel (0) target = $region9
    $region8: #{tpu_custom_call.1} parent=1 // pred_region
      %s15 = ssub.s32 2816, 2816
      %16 = vsyncadd [#allocation3], %s15
      %s17 = sshll.u32 [#allocation2], 4
      %s18 = int_to_ptr.vmem [resolvable:$true] %s17
      %23 = dma.hbm_to_vmem [thread:$0]  %s1, 2816, %s18, [#allocation3], 256, 256, 16
    $region9: #{tpu_custom_call.1} parent=1 // pred_fallthru
      _
    // Predicated region
    $region10: #{tpu_custom_call.1} parent=1 // pred_check
      _
    $region11: #{tpu_custom_call.1} parent=1 // pred_check_branch
      %25 = sbr.rel (0) target = $region13
    $region12: #{tpu_custom_call.1} parent=1 // pred_region
      _
    $region13: #{tpu_custom_call.1} parent=1 // pred_fallthru
      _
    // Predicated region
    $region14: #{tpu_custom_call.1} parent=1 // pred_check
      _
    $region15: #{tpu_custom_call.1} parent=1 // pred_check_branch
      %27 = sbr.rel (0) target = $region17
    $region16: #{tpu_custom_call.1} parent=1 // pred_region
      %28 = dma.done [#allocation3], 2816
    $region17: #{tpu_custom_call.1} parent=1 // pred_fallthru
      _
    %v29 = vld [vmem:[%s0] sm:$0xff]
    %v30 = vld [vmem:[%s0 + $0x8] sm:$0xff]
    %v31 = vld [vmem:[#allocation2] sm:$0xff]
    %v32 = vld [vmem:[#allocation2 + $0x8] sm:$0xff]
    %v33 = vmul.f32 %v29, %v31
    %v34 = vmul.f32 %v30, %v32
    %s35 = scalar_lea.vmem [#allocation2], 16
    %v36 = vld [vmem:[%s35] sm:$0xff]
    %v37 = vld [vmem:[%s35 + $0x8] sm:$0xff]
    %v38 = vadd.f32 %v33, %v36
    %v39 = vadd.f32 %v34, %v37
    %v40 = vmax.f32 %v38, 0.0
    %v41 = vmax.f32 %v39, 0.0
    %s42 = scalar_lea.vmem [#allocation2], 32
    %v43 = vld [vmem:[%s42] sm:$0xff]
    %v44 = vld [vmem:[%s42 + $0x8] sm:$0xff]
    %47 = vrot.lane.b32.xlu0 %v43, 94
    %v48 = vpop.permute.xlu0 %47
    %49 = vrot.lane.b32.xlu0 %v44, 94
    %v50 = vpop.permute.xlu0 %49
    %vm51 = vcmask 769024
    %v52 = vsel %vm51, %v48, %v50
    %v56 = vmul.f32 %v48, 0.0
    %v57 = vmul.f32 %v40, %v52
    %v58 = vmul.f32 %v41, %v50
    %v59 = vadd.f32 %v56, 0.0
    %v60 = vadd.f32 %v57, 0.0
    %v61 = vadd.f32 %v58, 0.0
    %s62 = scalar_lea.vmem [#allocation2], 48
    %v63 = vld [vmem:[%s62] sm:$0xff]
    %v64 = vld [vmem:[%s62 + $0x8] sm:$0xff]
    %67 = vrot.lane.b32.xlu0 %v63, 96
    %v68 = vpop.permute.xlu0 %67
    %69 = vrot.lane.b32.xlu0 %v64, 96
    %v70 = vpop.permute.xlu0 %69
    %vm71 = vcmask 785408
    %v72 = vsel %vm71, %v68, %v70
    %v76 = vmul.f32 %v68, 0.0
    %v77 = vmul.f32 %v40, %v72
    %v78 = vmul.f32 %v41, %v70
    %82 = vrot.lane.b32.xlu0 %v76, 126
    %v83 = vpop.permute.xlu0 %82
    %84 = vrot.lane.b32.xlu0 %v77, 126
    %v85 = vpop.permute.xlu0 %84
    %86 = vrot.lane.b32.xlu0 %v78, 126
    %v87 = vpop.permute.xlu0 %86
    %vm88 = vcmask 1031168
    %v89 = vsel %vm88, %v83, %v85
    %v90 = vsel %vm88, %v85, %v87
    %v94 = vadd.f32 %v59, %v89
    %v95 = vadd.f32 %v60, %v90
    %v96 = vadd.f32 %v61, %v87
    %s97 = scalar_lea.vmem [#allocation2], 64
    %v98 = vld [vmem:[%s97] sm:$0xff]
    %v99 = vld [vmem:[%s97 + $0x8] sm:$0xff]
    %102 = vrot.lane.b32.xlu0 %v98, 98
    %v103 = vpop.permute.xlu0 %102
    %104 = vrot.lane.b32.xlu0 %v99, 98
    %v105 = vpop.permute.xlu0 %104
    %vm106 = vcmask 801792
    %v107 = vsel %vm106, %v103, %v105
    %v111 = vmul.f32 %v103, 0.0
    %v112 = vmul.f32 %v40, %v107
    %v113 = vmul.f32 %v41, %v105
    %117 = vrot.lane.b32.xlu0 %v111, 124
    %v118 = vpop.permute.xlu0 %117
    %119 = vrot.lane.b32.xlu0 %v112, 124
    %v120 = vpop.permute.xlu0 %119
    %121 = vrot.lane.b32.xlu0 %v113, 124
    %v122 = vpop.permute.xlu0 %121
    %vm123 = vcmask 1014784
    %v124 = vsel %vm123, %v118, %v120
    %v125 = vsel %vm123, %v120, %v122
    %v129 = vadd.f32 %v94, %v124
    %v130 = vadd.f32 %v95, %v125
    %v131 = vadd.f32 %v96, %v122
    %s132 = scalar_lea.vmem [#allocation2], 80
    %v133 = vld [vmem:[%s132] sm:$0xff]
    %v134 = vld [vmem:[%s132 + $0x8] sm:$0xff]
    %137 = vrot.lane.b32.xlu0 %v133, 126
    %v138 = vpop.permute.xlu0 %137
    %139 = vrot.lane.b32.xlu0 %v134, 126
    %v140 = vpop.permute.xlu0 %139
    %v141 = vsel %vm88, %v138, %v140
    %v145 = vmul.f32 %v138, 0.0
    %v146 = vmul.f32 %v40, %v141
    %v147 = vmul.f32 %v41, %v140
    %151 = vrot.lane.b32.xlu0 %v145, 96
    %v152 = vpop.permute.xlu0 %151
    %153 = vrot.lane.b32.xlu0 %v146, 96
    %v154 = vpop.permute.xlu0 %153
    %155 = vrot.lane.b32.xlu0 %v147, 96
    %v156 = vpop.permute.xlu0 %155
    %v157 = vsel %vm71, %v152, %v154
    %v158 = vsel %vm71, %v154, %v156
    %v162 = vadd.f32 %v129, %v157
    %v163 = vadd.f32 %v130, %v158
    %v164 = vadd.f32 %v131, %v156
    %s165 = scalar_lea.vmem [#allocation2], 96
    %v166 = vld [vmem:[%s165] sm:$0xff]
    %v167 = vld [vmem:[%s165 + $0x8] sm:$0xff]
    %v168 = vmul.f32 %v40, %v166
    %v169 = vmul.f32 %v41, %v167
    %172 = vrot.lane.b32.xlu0 %v168, 94
    %v173 = vpop.permute.xlu0 %172
    %174 = vrot.lane.b32.xlu0 %v169, 94
    %v175 = vpop.permute.xlu0 %174
    %v176 = vsel %vm51, %v173, %v175
    %v180 = vadd.f32 %v162, %v173
    %v181 = vadd.f32 %v163, %v176
    %v182 = vadd.f32 %v164, %v175
    %s183 = scalar_lea.vmem [#allocation2], 112
    %v184 = vld [vmem:[%s183] sm:$0xff]
    %v185 = vld [vmem:[%s183 + $0x8] sm:$0xff]
    %188 = vrot.lane.b32.xlu0 %v184, 2
    %v189 = vpop.permute.xlu0 %188
    %190 = vrot.lane.b32.xlu0 %v185, 2
    %v191 = vpop.permute.xlu0 %190
    %vm192 = vcmask 15360
    %v193 = vsel %vm192, %v189, %v191
    %v197 = vmul.f32 %v40, %v189
    %v198 = vmul.f32 %v41, %v193
    %v199 = vmul.f32 %v191, 0.0
    %203 = vrot.lane.b32.xlu0 %v197, 92
    %v204 = vpop.permute.xlu0 %203
    %205 = vrot.lane.b32.xlu0 %v198, 92
    %v206 = vpop.permute.xlu0 %205
    %207 = vrot.lane.b32.xlu0 %v199, 92
    %v208 = vpop.permute.xlu0 %207
    %vm209 = vcmask 752640
    %v210 = vsel %vm209, %v204, %v206
    %v211 = vsel %vm209, %v206, %v208
    %v215 = vadd.f32 %v180, %v204
    %v216 = vadd.f32 %v181, %v210
    %v217 = vadd.f32 %v182, %v211
    %s218 = scalar_lea.vmem [#allocation2], 128
    %v219 = vld [vmem:[%s218] sm:$0xff]
    %v220 = vld [vmem:[%s218 + $0x8] sm:$0xff]
    %223 = vrot.lane.b32.xlu0 %v219, 30
    %v224 = vpop.permute.xlu0 %223
    %225 = vrot.lane.b32.xlu0 %v220, 30
    %v226 = vpop.permute.xlu0 %225
    %vm227 = vcmask 244736
    %v228 = vsel %vm227, %v224, %v226
    %v232 = vmul.f32 %v40, %v224
    %v233 = vmul.f32 %v41, %v228
    %v234 = vmul.f32 %v226, 0.0
    %238 = vrot.lane.b32.xlu0 %v232, 64
    %v239 = vpop.permute.xlu0 %238
    %240 = vrot.lane.b32.xlu0 %v233, 64
    %v241 = vpop.permute.xlu0 %240
    %242 = vrot.lane.b32.xlu0 %v234, 64
    %v243 = vpop.permute.xlu0 %242
    %vm244 = vcmask 523264
    %v245 = vsel %vm244, %v239, %v241
    %v246 = vsel %vm244, %v241, %v243
    %v250 = vadd.f32 %v215, %v239
    %v251 = vadd.f32 %v216, %v245
    %v252 = vadd.f32 %v217, %v246
    %s253 = scalar_lea.vmem [#allocation2], 144
    %v254 = vld [vmem:[%s253] sm:$0xff]
    %v255 = vld [vmem:[%s253 + $0x8] sm:$0xff]
    %258 = vrot.lane.b32.xlu0 %v254, 32
    %v259 = vpop.permute.xlu0 %258
    %260 = vrot.lane.b32.xlu0 %v255, 32
    %v261 = vpop.permute.xlu0 %260
    %vm262 = vcmask 261120
    %v263 = vsel %vm262, %v259, %v261
    %v267 = vmul.f32 %v40, %v259
    %v268 = vmul.f32 %v41, %v263
    %v269 = vmul.f32 %v261, 0.0
    %273 = vrot.lane.b32.xlu0 %v267, 62
    %v274 = vpop.permute.xlu0 %273
    %275 = vrot.lane.b32.xlu0 %v268, 62
    %v276 = vpop.permute.xlu0 %275
    %277 = vrot.lane.b32.xlu0 %v269, 62
    %v278 = vpop.permute.xlu0 %277
    %vm279 = vcmask 506880
    %v280 = vsel %vm279, %v274, %v276
    %v281 = vsel %vm279, %v276, %v278
    %v285 = vadd.f32 %v250, %v274
    %v286 = vadd.f32 %v251, %v280
    %v287 = vadd.f32 %v252, %v281
    %s288 = scalar_lea.vmem [#allocation2], 160
    %v289 = vld [vmem:[%s288] sm:$0xff]
    %v290 = vld [vmem:[%s288 + $0x8] sm:$0xff]
    %293 = vrot.lane.b32.xlu0 %v289, 34
    %v294 = vpop.permute.xlu0 %293
    %295 = vrot.lane.b32.xlu0 %v290, 34
    %v296 = vpop.permute.xlu0 %295
    %vm297 = vcmask 277504
    %v298 = vsel %vm297, %v294, %v296
    %v302 = vmul.f32 %v40, %v294
    %v303 = vmul.f32 %v41, %v298
    %v304 = vmul.f32 %v296, 0.0
    %308 = vrot.lane.b32.xlu0 %v302, 60
    %v309 = vpop.permute.xlu0 %308
    %310 = vrot.lane.b32.xlu0 %v303, 60
    %v311 = vpop.permute.xlu0 %310
    %312 = vrot.lane.b32.xlu0 %v304, 60
    %v313 = vpop.permute.xlu0 %312
    %vm314 = vcmask 490496
    %v315 = vsel %vm314, %v309, %v311
    %v316 = vsel %vm314, %v311, %v313
    %v320 = vadd.f32 %v285, %v309
    %v321 = vadd.f32 %v286, %v315
    %v322 = vadd.f32 %v287, %v316
    %s323 = scalar_lea.vmem %s2, 32
    %v324 = vld [vmem:[%s323] sm:$0xff]
    %v325 = vld [vmem:[%s2] sm:$0xff]
    %327 = vset.pattern.permute.xlu0 0
    %328 = vperm.xlu0 %327, %v325
    %v329 = vpop.permute.xlu0 %328
    %v331 = vlaneseq
    %v332 = vshrl.u32 %v331, 7
    %v333 = vsub.s32 0, %v332
    %v334 = vrot.slane %v320, %v333
    %v335 = vlaneseq
    %v336 = vshrl.u32 %v335, 7
    %v337 = vsub.s32 0, %v336
    %v338 = vrot.slane %v321, %v337
    %v339 = vlaneseq
    %v340 = vshrl.u32 %v339, 7
    %v341 = vsub.s32 0, %v340
    %v342 = vrot.slane %v322, %v341
    %v343 = vmul.f32 %v329, %v334
    %v344 = vmul.f32 %v329, %v338
    %v345 = vmul.f32 %v329, %v342
    %347 = vset.pattern.permute.xlu0 0
    %348 = vperm.xlu0 %347, %v324
    %v349 = vpop.permute.xlu0 %348
    %v351 = vadd.f32 %v349, %v343
    %v352 = vadd.f32 %v349, %v344
    %v353 = vadd.f32 %v349, %v345
    %s354 = scalar_lea.vmem %s2, 8
    %v355 = vld [vmem:[%s354] sm:$0xff]
    %357 = vset.pattern.permute.xlu0 0
    %358 = vperm.xlu0 %357, %v355
    %v359 = vpop.permute.xlu0 %358
    %v361 = vlaneseq
    %v362 = vshrl.u32 %v361, 7
    %v363 = vsub.s32 1, %v362
    %v364 = vrot.slane %v320, %v363
    %v365 = vlaneseq
    %v366 = vshrl.u32 %v365, 7
    %v367 = vsub.s32 1, %v366
    %v368 = vrot.slane %v321, %v367
    %v369 = vlaneseq
    %v370 = vshrl.u32 %v369, 7
    %v371 = vsub.s32 1, %v370
    %v372 = vrot.slane %v322, %v371
    %v373 = vmul.f32 %v359, %v364
    %v374 = vmul.f32 %v359, %v368
    %v375 = vmul.f32 %v359, %v372
    %v376 = vadd.f32 %v351, %v373
    %v377 = vadd.f32 %v352, %v374
    %v378 = vadd.f32 %v353, %v375
    %s379 = scalar_lea.vmem %s2, 16
    %v380 = vld [vmem:[%s379] sm:$0xff]
    %382 = vset.pattern.permute.xlu0 0
    %383 = vperm.xlu0 %382, %v380
    %v384 = vpop.permute.xlu0 %383
    %v386 = vlaneseq
    %v387 = vshrl.u32 %v386, 7
    %v388 = vsub.s32 2, %v387
    %v389 = vrot.slane %v320, %v388
    %v390 = vlaneseq
    %v391 = vshrl.u32 %v390, 7
    %v392 = vsub.s32 2, %v391
    %v393 = vrot.slane %v321, %v392
    %v394 = vlaneseq
    %v395 = vshrl.u32 %v394, 7
    %v396 = vsub.s32 2, %v395
    %v397 = vrot.slane %v322, %v396
    %v398 = vmul.f32 %v384, %v389
    %v399 = vmul.f32 %v384, %v393
    %v400 = vmul.f32 %v384, %v397
    %v401 = vadd.f32 %v376, %v398
    %v402 = vadd.f32 %v377, %v399
    %v403 = vadd.f32 %v378, %v400
    %s404 = scalar_lea.vmem %s2, 24
    %v405 = vld [vmem:[%s404] sm:$0xff]
    %407 = vset.pattern.permute.xlu0 0
    %408 = vperm.xlu0 %407, %v405
    %v409 = vpop.permute.xlu0 %408
    %v411 = vlaneseq
    %v412 = vshrl.u32 %v411, 7
    %v413 = vsub.s32 3, %v412
    %v414 = vrot.slane %v320, %v413
    %v415 = vlaneseq
    %v416 = vshrl.u32 %v415, 7
    %v417 = vsub.s32 3, %v416
    %v418 = vrot.slane %v321, %v417
    %v419 = vlaneseq
    %v420 = vshrl.u32 %v419, 7
    %v421 = vsub.s32 3, %v420
    %v422 = vrot.slane %v322, %v421
    %v423 = vmul.f32 %v409, %v414
    %v424 = vmul.f32 %v409, %v418
    %v425 = vmul.f32 %v409, %v422
    %v426 = vadd.f32 %v401, %v423
    %v427 = vadd.f32 %v402, %v424
    %v428 = vadd.f32 %v403, %v425
    %v429 = vlaneseq
    %v430 = vshrl.u32 %v429, 7
    %v431 = vsub.s32 4, %v430
    %v432 = vrot.slane %v320, %v431
    %v433 = vlaneseq
    %v434 = vshrl.u32 %v433, 7
    %v435 = vsub.s32 4, %v434
    %v436 = vrot.slane %v321, %v435
    %v437 = vlaneseq
    %v438 = vshrl.u32 %v437, 7
    %v439 = vsub.s32 4, %v438
    %v440 = vrot.slane %v322, %v439
    %v441 = vmul.f32 %v329, %v432
    %v442 = vmul.f32 %v329, %v436
    %v443 = vmul.f32 %v329, %v440
    %v444 = vadd.f32 %v349, %v441
    %v445 = vadd.f32 %v349, %v442
    %v446 = vadd.f32 %v349, %v443
    %v447 = vlaneseq
    %v448 = vshrl.u32 %v447, 7
    %v449 = vsub.s32 5, %v448
    %v450 = vrot.slane %v320, %v449
    %v451 = vlaneseq
    %v452 = vshrl.u32 %v451, 7
    %v453 = vsub.s32 5, %v452
    %v454 = vrot.slane %v321, %v453
    %v455 = vlaneseq
    %v456 = vshrl.u32 %v455, 7
    %v457 = vsub.s32 5, %v456
    %v458 = vrot.slane %v322, %v457
    %v459 = vmul.f32 %v359, %v450
    %v460 = vmul.f32 %v359, %v454
    %v461 = vmul.f32 %v359, %v458
    %v462 = vadd.f32 %v444, %v459
    %v463 = vadd.f32 %v445, %v460
    %v464 = vadd.f32 %v446, %v461
    %v465 = vlaneseq
    %v466 = vshrl.u32 %v465, 7
    %v467 = vsub.s32 6, %v466
    %v468 = vrot.slane %v320, %v467
    %v469 = vlaneseq
    %v470 = vshrl.u32 %v469, 7
    %v471 = vsub.s32 6, %v470
    %v472 = vrot.slane %v321, %v471
    %v473 = vlaneseq
    %v474 = vshrl.u32 %v473, 7
    %v475 = vsub.s32 6, %v474
    %v476 = vrot.slane %v322, %v475
    %v477 = vmul.f32 %v384, %v468
    %v478 = vmul.f32 %v384, %v472
    %v479 = vmul.f32 %v384, %v476
    %v480 = vadd.f32 %v462, %v477
    %v481 = vadd.f32 %v463, %v478
    %v482 = vadd.f32 %v464, %v479
    %v483 = vlaneseq
    %v484 = vshrl.u32 %v483, 7
    %v485 = vsub.s32 7, %v484
    %v486 = vrot.slane %v320, %v485
    %v487 = vlaneseq
    %v488 = vshrl.u32 %v487, 7
    %v489 = vsub.s32 7, %v488
    %v490 = vrot.slane %v321, %v489
    %v491 = vlaneseq
    %v492 = vshrl.u32 %v491, 7
    %v493 = vsub.s32 7, %v492
    %v494 = vrot.slane %v322, %v493
    %v495 = vmul.f32 %v409, %v486
    %v496 = vmul.f32 %v409, %v490
    %v497 = vmul.f32 %v409, %v494
    %v498 = vadd.f32 %v480, %v495
    %v499 = vadd.f32 %v481, %v496
    %v500 = vadd.f32 %v482, %v497
    %507 = vrot.lane.b32.xlu0 %v426, 34
    %v508 = vpop.permute.xlu0 %507
    %509 = vrot.lane.b32.xlu0 %v427, 34
    %v510 = vpop.permute.xlu0 %509
    %511 = vrot.lane.b32.xlu0 %v428, 34
    %v512 = vpop.permute.xlu0 %511
    %513 = vrot.lane.b32.xlu0 %v498, 34
    %v514 = vpop.permute.xlu0 %513
    %515 = vrot.lane.b32.xlu0 %v499, 34
    %v516 = vpop.permute.xlu0 %515
    %517 = vrot.lane.b32.xlu0 %v500, 34
    %v518 = vpop.permute.xlu0 %517
    %v519 = vsel %vm297, %v508, %v510
    %v520 = vsel %vm297, %v510, %v512
    %v521 = vsel %vm297, %v514, %v516
    %v522 = vsel %vm297, %v516, %v518
    %527 = vst [vmem:[#allocation5] sm:$0xff] %v519
    %528 = vst [vmem:[#allocation5 + $0x8] sm:$0xff] %v520
    %529 = vst [vmem:[#allocation5 + $0x10] sm:$0xff] %v521
    %530 = vst [vmem:[#allocation5 + $0x18] sm:$0xff] %v522
    // Predicated region
    $region18: #{tpu_custom_call.1} parent=1 // pred_check
      _
    $region19: #{tpu_custom_call.1} parent=1 // pred_check_branch
      %532 = sbr.rel (0) target = $region21
    $region20: #{tpu_custom_call.1} parent=1 // pred_region
      %s534 = ssub.s32 512, 512
      %535 = vsyncadd [#allocation4], %s534
      %s536 = sshll.u32 [#allocation5], 4
      %s537 = int_to_ptr.vmem [resolvable:$true] %s536
      %542 = dma.vmem_to_hbm [thread:$0]  %s537, 512, %s3, [#allocation4], 256, 256, 16
    $region21: #{tpu_custom_call.1} parent=1 // pred_fallthru
      _
    // Predicated region
    $region22: #{tpu_custom_call.1} parent=1 // pred_check
      _
    $region23: #{tpu_custom_call.1} parent=1 // pred_check_branch
      %544 = sbr.rel (0) target = $region25
    $region24: #{tpu_custom_call.1} parent=1 // pred_region
      %545 = dma.done [#allocation4], 512
    $region25: #{tpu_custom_call.1} parent=1 // pred_fallthru
      _
    %546 = vsyncpa [#allocation3], 1
    %547 = vsyncpa [#allocation4], 1

</llo_original>
